<compile_context>
chip_gen: v5e
topology: v5e:2x2
jax: 0.10.0
libtpu: 0.0.40
codegen_flags: <defaults>
</compile_context>

<pallas_src>
import functools

import jax
import jax.numpy as jnp
from jax import lax
from jax.experimental import pallas as pl
from jax.experimental.pallas import tpu as pltpu


def _round_up(x, m):
    return (x + m - 1) // m * m


def _vmem_limit_bytes():
    # Budget from the actual generation (v7x has 64 MiB vs 128 MiB on v5e/v6e).
    cap = None
    try:
        cap = getattr(pltpu.get_tpu_info(), "vmem_capacity_bytes", None)
    except Exception:
        cap = None
    if not cap:
        cap = 64 * 1024 * 1024
    return int(min(cap * 3 // 4, 96 * 1024 * 1024))


# --------------------------------------------------------------------------
# Pass 1: per-node reduction (sum, sum-of-squares, degree) + finalize stats.
# Grid over E tiles ("arbitrary"), resident [N, 6] accumulator scratch.
# --------------------------------------------------------------------------
def _stats_kernel(a_ref, e_ref, stats_ref, acc_ref, *, eps, feat_dim):
    i = pl.program_id(0)

    @pl.when(i == 0)
    def _():
        acc_ref[...] = jnp.zeros_like(acc_ref)

    # Per-edge pre-reduction over F in f32 on the VPU: keeps precision and
    # shrinks the MXU RHS to 6 lanes regardless of F.
    e = e_ref[...].astype(jnp.float32)                        # [tE, F]
    se = jnp.sum(e, axis=1, keepdims=True)                    # [tE, 1] sum(e)
    sq = jnp.sum(e * e, axis=1, keepdims=True)                # [tE, 1] sum(e^2)
    ones = jnp.ones_like(se)
    ops32 = jnp.concatenate([se, sq, ones], axis=1)           # [tE, 3] f32

    # hi/lo bf16 split (error compensation): hi + lo == ops32 to ~2^-17 rel.
    hi = ops32.astype(jnp.bfloat16)
    lo = (ops32 - hi.astype(jnp.float32)).astype(jnp.bfloat16)
    ops = jnp.concatenate([hi, lo], axis=1)                   # [tE, 6] bf16

    # bf16 incidence tile fed straight to the MXU (no f32 up-cast copy).
    # Contract over the edge (sublane) axis: A^T @ ops -> [N, 6], f32 accum.
    acc_ref[...] += lax.dot_general(
        a_ref[...], ops, (((0,), (0,)), ((), ())),
        preferred_element_type=jnp.float32)

    @pl.when(i == pl.num_programs(0) - 1)
    def _():
        acc = acc_ref[...]                                    # [N, 6]
        s = acc[:, 0:1] + acc[:, 3:4]                         # recombine hi+lo
        q = acc[:, 1:2] + acc[:, 4:5]
        deg = acc[:, 2:3]

        count = deg * jnp.float32(feat_dim)
        count_safe = jnp.maximum(count, 1.0)
        mean = s / count_safe
        # unbiased variance (torch.std default): sum((x - mu)^2) / (n - 1)
        var = (q - count * mean * mean) / jnp.maximum(count - 1.0, 1.0)
        std = jnp.sqrt(jnp.maximum(var, 0.0))

        denom = std + jnp.float32(eps)
        r = pl.reciprocal(denom, approx=True)                 # EUP slot (cheap)
        inv = r * (2.0 - denom * r)                           # Newton -> f32 accuracy
        # keep zero-in-degree rows clean
        mean = jnp.where(deg > 0.0, mean, 0.0)
        inv = jnp.where(deg > 0.0, inv, 0.0)

        stats_ref[...] = jnp.concatenate([mean, inv], axis=1)  # [N, 2]


# --------------------------------------------------------------------------
# Pass 2: normalize edges.  Lane-dense: k = 128/F edges per 128-lane row.
# Per-edge mean / inv_std arrive as [rows, k]; expanded across their F lanes
# with a tiny resident [k, L] expansion matmul (no [E, N] read, no gather).
# --------------------------------------------------------------------------
def _normalize_kernel(e_ref, em_ref, einv_ref, p_ref, gamma_ref, beta_ref, o_ref):
    p = p_ref[...]                                            # [k, L]
    mean = jnp.dot(em_ref[...], p, preferred_element_type=jnp.float32)   # [tR, L]
    inv = jnp.dot(einv_ref[...], p, preferred_element_type=jnp.float32)  # [tR, L]
    e = e_ref[...].astype(jnp.float32)                        # [tR, L]
    out = gamma_ref[...] * ((e - mean) * inv) + beta_ref[...]
    o_ref[...] = out.astype(o_ref.dtype)


# --------------------------------------------------------------------------
# Wrapper
# --------------------------------------------------------------------------
def adja_edge_norm(e, dst, num_nodes, gamma, beta, eps=1e-5, block_e=1024):
    """e: [E, F] edge features, dst: [E] int32 destination node per edge."""
    E, F = e.shape
    assert gamma.shape == (F,) and beta.shape == (F,)

    # Lane-packing factor for pass 2 (k edges share one 128-lane row).
    k = (128 // F) if (128 % F == 0) else 1
    granule = 8 * k                      # keeps pass-2 row tiles 8-sublane aligned
    block_e = _round_up(max(1, min(block_e, E)), granule)
    E_pad = _round_up(E, block_e)
    n_tiles = E_pad // block_e

    # Pad edges; padded rows get dst == num_nodes -> all-zero one-hot row, so
    # they contribute nothing to sums / degrees.
    pad = E_pad - E
    e_pad = jnp.pad(e, ((0, pad), (0, 0)))
    dst_pad = jnp.pad(dst.astype(jnp.int32), (0, pad), constant_values=num_nodes)

    # Single edge-major bf16 one-hot incidence [E_pad, N]; read from HBM once.
    a = jax.nn.one_hot(dst_pad, num_nodes, dtype=jnp.bfloat16)

    vmem_limit = _vmem_limit_bytes()

    # ---------------- pass 1: node stats ----------------
    stats = pl.pallas_call(
        functools.partial(_stats_kernel, eps=eps, feat_dim=F),
        out_shape=jax.ShapeDtypeStruct((num_nodes, 2), jnp.float32),
        grid_spec=pltpu.PrefetchScalarGridSpec(
            num_scalar_prefetch=0,
            grid=(n_tiles,),
            in_specs=[
                pl.BlockSpec((block_e, num_nodes), lambda i: (i, 0)),   # A tile (bf16)
                pl.BlockSpec((block_e, F), lambda i: (i, 0)),           # e tile
            ],
            out_specs=pl.BlockSpec((num_nodes, 2), lambda i: (0, 0)),   # resident
            scratch_shapes=[pltpu.VMEM((num_nodes, 6), jnp.float32)],
        ),
        compiler_params=pltpu.CompilerParams(
            dimension_semantics=("arbitrary",),
            vmem_limit_bytes=vmem_limit),
        cost_estimate=pl.CostEstimate(
            flops=2 * E_pad * num_nodes * 6 + 4 * E_pad * F,
            transcendentals=num_nodes,
            bytes_accessed=E_pad * num_nodes * 2 + E_pad * F * 4 + num_nodes * 8),
    )(a, e_pad)

    # Tiny per-edge gather of the 2 node scalars in XLA — this replaces the
    # second full incidence read + 128-lane gather matmul of the old pass 2.
    dst_clip = jnp.clip(dst_pad, 0, num_nodes - 1)
    edge_stats = stats[dst_clip]                               # [E_pad, 2]
    em = edge_stats[:, 0]
    einv = edge_stats[:, 1]

    # ---------------- pass 2: normalize edges (lane-dense) ----------------
    L = k * F
    R = E_pad // k
    block_r = block_e // k                                     # multiple of 8
    e_rows = e_pad.reshape(R, L)
    em_rows = em.reshape(R, k)
    einv_rows = einv.reshape(R, k)
    # Expansion matrix: row j is 1 on lanes [j*F, (j+1)*F)  -> broadcast per edge.
    p = jnp.repeat(jnp.eye(k, dtype=jnp.float32), F, axis=1)   # [k, L]
    gamma_t = jnp.tile(gamma.astype(jnp.float32), (k,)).reshape(1, L)
    beta_t = jnp.tile(beta.astype(jnp.float32), (k,)).reshape(1, L)

    out_rows = pl.pallas_call(
        _normalize_kernel,
        out_shape=jax.ShapeDtypeStruct((R, L), e.dtype),
        grid_spec=pltpu.PrefetchScalarGridSpec(
            num_scalar_prefetch=0,
            grid=(n_tiles,),
            in_specs=[
                pl.BlockSpec((block_r, L), lambda i: (i, 0)),   # packed e tile
                pl.BlockSpec((block_r, k), lambda i: (i, 0)),   # per-edge mean
                pl.BlockSpec((block_r, k), lambda i: (i, 0)),   # per-edge inv_std
                pl.BlockSpec((k, L), lambda i: (0, 0)),         # expansion (resident)
                pl.BlockSpec((1, L), lambda i: (0, 0)),         # gamma (resident)
                pl.BlockSpec((1, L), lambda i: (0, 0)),         # beta  (resident)
            ],
            out_specs=pl.BlockSpec((block_r, L), lambda i: (i, 0)),
        ),
        compiler_params=pltpu.CompilerParams(
            dimension_semantics=("parallel",),
            vmem_limit_bytes=vmem_limit),
        cost_estimate=pl.CostEstimate(
            flops=4 * R * k * L + 4 * E_pad * F,
            transcendentals=0,
            bytes_accessed=2 * E_pad * F * 4 + E_pad * 8 + (k + 2) * L * 4),
    )(e_rows, em_rows, einv_rows, p, gamma_t, beta_t)

    return out_rows.reshape(E_pad, F)[:E]


# --------------------------------------------------------------------------
# Pure-JAX reference mirroring the DGL semantics.
# --------------------------------------------------------------------------
def adja_edge_norm_ref(e, dst, num_nodes, gamma, beta, eps=1e-5):
    E, F = e.shape
    e32 = e.astype(jnp.float32)
    s = jax.ops.segment_sum(jnp.sum(e32, axis=1), dst, num_segments=num_nodes)
    q = jax.ops.segment_sum(jnp.sum(e32 * e32, axis=1), dst, num_segments=num_nodes)
    deg = jax.ops.segment_sum(jnp.ones((E,), jnp.float32), dst, num_segments=num_nodes)
    count = deg * F
    mean = s / jnp.maximum(count, 1.0)
    var = (q - count * mean * mean) / jnp.maximum(count - 1.0, 1.0)
    std = jnp.sqrt(jnp.maximum(var, 0.0))
    em = mean[dst][:, None]
    es = std[dst][:, None]
    norm_e = (e32 - em) / (es + eps)
    return gamma[None, :] * norm_e + beta[None, :]


if __name__ == "__main__":
    key = jax.random.PRNGKey(0)
    num_nodes = 16      # N
    num_edges = 64      # E
    num_features = 32   # F  (AdjaEdgeNorm(num_features=32))

    k1, k2 = jax.random.split(key)
    e = jax.random.normal(k1, (num_edges, num_features), dtype=jnp.float32)
    # Destination node per edge; first N edges guarantee every node has in-degree >= 1.
    dst_rand = jax.random.randint(k2, (num_edges - num_nodes,), 0, num_nodes, dtype=jnp.int32)
    dst = jnp.concatenate([jnp.arange(num_nodes, dtype=jnp.int32), dst_rand])

    # Parameters as in __init__ (affine=True): gamma = ones(F), beta = zeros(F).
    gamma = jnp.ones((num_features,), jnp.float32)
    beta = jnp.zeros((num_features,), jnp.float32)

    # block_e=16 is rounded up to 32 -> a 2-step grid so pipelining is exercised.
    out = adja_edge_norm(e, dst, num_nodes, gamma, beta, eps=1e-5, block_e=16)
    out = jax.block_until_ready(out)

    ref = adja_edge_norm_ref(e, dst, num_nodes, gamma, beta, eps=1e-5)
    assert out.shape == (num_edges, num_features)
    err = float(jnp.max(jnp.abs(out - ref)))
    assert err < 1e-3, f"max abs err {err}"

    print("KERNEL_OK")
</pallas_src>

<mosaic_0001>
module attributes {stable_mosaic.version = 11 : i64} {
  func.func @_stats_kernel(%arg0: i32, %arg1: memref<32x16xbf16, #tpu.memory_space<vmem>>, %arg2: memref<32x32xf32, #tpu.memory_space<vmem>>, %arg3: memref<16x2xf32, #tpu.memory_space<vmem>>, %arg4: memref<16x6xf32, #tpu.memory_space<vmem>>) attributes {dimension_semantics = [#tpu.dimension_semantics<arbitrary>], iteration_bounds = array<i64: 2>, scalar_prefetch = 0 : i64, scratch_operands = 1 : i64, tpu.core_type = #tpu.core_type<tc>, window_params = [{transform_indices = @transform_0, window_bounds = array<i64: 32, 16>}, {transform_indices = @transform_1, window_bounds = array<i64: 32, 32>}, {pipeline_mode = #tpu.pipeline_mode<synchronous>, transform_indices = @transform_2, window_bounds = array<i64: 16, 2>}]} {
    %c0_i32 = arith.constant 0 : i32
    %0 = arith.cmpi eq, %arg0, %c0_i32 : i32
    %1 = arith.extui %0 : i1 to i32
    %c0_i32_0 = arith.constant 0 : i32
    %2 = arith.cmpi ne, %1, %c0_i32_0 : i32
    scf.if %2 {
      %cst_12 = arith.constant 0.000000e+00 : f32
      %24 = vector.broadcast %cst_12 : f32 to vector<16x6xf32>
      %c0_13 = arith.constant 0 : index
      %c0_14 = arith.constant 0 : index
      %25 = vector.load %arg4[%c0_13, %c0_14] : memref<16x6xf32, #tpu.memory_space<vmem>>, vector<16x6xf32>
      tpu.vector_store %arg4[%c0_13, %c0_14], %24 {strides = array<i32>} : memref<16x6xf32, #tpu.memory_space<vmem>>, vector<16x6xf32>,
    } else {
    }
    %c0 = arith.constant 0 : index
    %c0_1 = arith.constant 0 : index
    %3 = vector.load %arg2[%c0, %c0_1] : memref<32x32xf32, #tpu.memory_space<vmem>>, vector<32x32xf32>
    %cst = arith.constant dense<0.000000e+00> : vector<32xf32>
    %4 = vector.multi_reduction <add>, %3, %cst [1] : vector<32x32xf32> to vector<32xf32>
    %5 = vector.shape_cast %4 : vector<32xf32> to vector<32x1xf32>
    %6 = arith.mulf %3, %3 : vector<32x32xf32>
    %cst_2 = arith.constant dense<0.000000e+00> : vector<32xf32>
    %7 = vector.multi_reduction <add>, %6, %cst_2 [1] : vector<32x32xf32> to vector<32xf32>
    %8 = vector.shape_cast %7 : vector<32xf32> to vector<32x1xf32>
    %cst_3 = arith.constant 1.000000e+00 : f32
    %9 = vector.broadcast %cst_3 : f32 to vector<32x1xf32>
    %10 = tpu.concatenate %5, %8, %9 in 1 : vector<32x1xf32>, vector<32x1xf32>, vector<32x1xf32> -> vector<32x3xf32>
    %11 = arith.truncf %10 : vector<32x3xf32> to vector<32x3xbf16>
    %12 = arith.extf %11 : vector<32x3xbf16> to vector<32x3xf32>
    %13 = arith.subf %10, %12 : vector<32x3xf32>
    %14 = arith.truncf %13 : vector<32x3xf32> to vector<32x3xbf16>
    %15 = tpu.concatenate %11, %14 in 1 : vector<32x3xbf16>, vector<32x3xbf16> -> vector<32x6xbf16>
    %c0_4 = arith.constant 0 : index
    %c0_5 = arith.constant 0 : index
    %16 = vector.load %arg4[%c0_4, %c0_5] : memref<16x6xf32, #tpu.memory_space<vmem>>, vector<16x6xf32>
    %c0_6 = arith.constant 0 : index
    %c0_7 = arith.constant 0 : index
    %17 = vector.load %arg1[%c0_6, %c0_7] : memref<32x16xbf16, #tpu.memory_space<vmem>>, vector<32x16xbf16>
    %cst_8 = arith.constant dense<0.000000e+00> : vector<16x6xf32>
    %18 = tpu.matmul %17, %15, %cst_8 {dimension_numbers = #tpu.dot_dimension_numbers<[0], [0], [1], [1], [0, 1, 1, 1], [], []>} : vector<32x16xbf16>, vector<32x6xbf16>, vector<16x6xf32> -> vector<16x6xf32>
    %19 = arith.addf %16, %18 : vector<16x6xf32>
    %c0_9 = arith.constant 0 : index
    %c0_10 = arith.constant 0 : index
    %20 = vector.load %arg4[%c0_9, %c0_10] : memref<16x6xf32, #tpu.memory_space<vmem>>, vector<16x6xf32>
    tpu.vector_store %arg4[%c0_9, %c0_10], %19 {strides = array<i32>} : memref<16x6xf32, #tpu.memory_space<vmem>>, vector<16x6xf32>,
    %c1_i32 = arith.constant 1 : i32
    %21 = arith.cmpi eq, %arg0, %c1_i32 : i32
    %22 = arith.extui %21 : i1 to i32
    %c0_i32_11 = arith.constant 0 : i32
    %23 = arith.cmpi ne, %22, %c0_i32_11 : i32
    scf.if %23 {
      %c0_12 = arith.constant 0 : index
      %c0_13 = arith.constant 0 : index
      %24 = vector.load %arg4[%c0_12, %c0_13] : memref<16x6xf32, #tpu.memory_space<vmem>>, vector<16x6xf32>
      %25 = vector.extract_strided_slice %24 {offsets = [0, 0], sizes = [16, 1], strides = [1, 1]} : vector<16x6xf32> to vector<16x1xf32>
      %26 = vector.extract_strided_slice %24 {offsets = [0, 3], sizes = [16, 1], strides = [1, 1]} : vector<16x6xf32> to vector<16x1xf32>
      %27 = arith.addf %25, %26 : vector<16x1xf32>
      %28 = vector.extract_strided_slice %24 {offsets = [0, 1], sizes = [16, 1], strides = [1, 1]} : vector<16x6xf32> to vector<16x1xf32>
      %29 = vector.extract_strided_slice %24 {offsets = [0, 4], sizes = [16, 1], strides = [1, 1]} : vector<16x6xf32> to vector<16x1xf32>
      %30 = arith.addf %28, %29 : vector<16x1xf32>
      %31 = vector.extract_strided_slice %24 {offsets = [0, 2], sizes = [16, 1], strides = [1, 1]} : vector<16x6xf32> to vector<16x1xf32>
      %cst_14 = arith.constant 3.200000e+01 : f32
      %32 = vector.broadcast %cst_14 : f32 to vector<16x1xf32>
      %33 = arith.mulf %31, %32 : vector<16x1xf32>
      %cst_15 = arith.constant 1.000000e+00 : f32
      %34 = vector.broadcast %cst_15 : f32 to vector<16x1xf32>
      %35 = arith.maximumf %33, %34 : vector<16x1xf32>
      %36 = arith.divf %27, %35 : vector<16x1xf32>
      %37 = arith.mulf %33, %36 : vector<16x1xf32>
      %38 = arith.mulf %37, %36 : vector<16x1xf32>
      %39 = arith.subf %30, %38 : vector<16x1xf32>
      %cst_16 = arith.constant 1.000000e+00 : f32
      %40 = vector.broadcast %cst_16 : f32 to vector<16x1xf32>
      %41 = arith.subf %33, %40 : vector<16x1xf32>
      %cst_17 = arith.constant 1.000000e+00 : f32
      %42 = vector.broadcast %cst_17 : f32 to vector<16x1xf32>
      %43 = arith.maximumf %41, %42 : vector<16x1xf32>
      %44 = arith.divf %39, %43 : vector<16x1xf32>
      %cst_18 = arith.constant 0.000000e+00 : f32
      %45 = vector.broadcast %cst_18 : f32 to vector<16x1xf32>
      %46 = arith.maximumf %44, %45 : vector<16x1xf32>
      %47 = math.sqrt %46 : vector<16x1xf32>
      %cst_19 = arith.constant 9.99999974E-6 : f32
      %48 = vector.broadcast %cst_19 : f32 to vector<16x1xf32>
      %49 = arith.addf %47, %48 : vector<16x1xf32>
      %50 = tpu.reciprocal %49 {approx = true} : vector<16x1xf32> -> vector<16x1xf32>
      %51 = arith.mulf %49, %50 : vector<16x1xf32>
      %cst_20 = arith.constant 2.000000e+00 : f32
      %52 = vector.broadcast %cst_20 : f32 to vector<16x1xf32>
      %53 = arith.subf %52, %51 : vector<16x1xf32>
      %54 = arith.mulf %50, %53 : vector<16x1xf32>
      %cst_21 = arith.constant 0.000000e+00 : f32
      %55 = vector.broadcast %cst_21 : f32 to vector<16x1xf32>
      %56 = arith.cmpf ogt, %31, %55 : vector<16x1xf32>
      %cst_22 = arith.constant 0.000000e+00 : f32
      %57 = vector.broadcast %cst_22 : f32 to vector<16x1xf32>
      %58 = arith.select %56, %36, %57 : vector<16x1xi1>, vector<16x1xf32>
      %cst_23 = arith.constant 0.000000e+00 : f32
      %59 = vector.broadcast %cst_23 : f32 to vector<16x1xf32>
      %60 = arith.cmpf ogt, %31, %59 : vector<16x1xf32>
      %cst_24 = arith.constant 0.000000e+00 : f32
      %61 = vector.broadcast %cst_24 : f32 to vector<16x1xf32>
      %62 = arith.select %60, %54, %61 : vector<16x1xi1>, vector<16x1xf32>
      %63 = tpu.concatenate %58, %62 in 1 : vector<16x1xf32>, vector<16x1xf32> -> vector<16x2xf32>
      %c0_25 = arith.constant 0 : index
      %c0_26 = arith.constant 0 : index
      %64 = vector.load %arg3[%c0_25, %c0_26] : memref<16x2xf32, #tpu.memory_space<vmem>>, vector<16x2xf32>
      tpu.vector_store %arg3[%c0_25, %c0_26], %63 {strides = array<i32>} : memref<16x2xf32, #tpu.memory_space<vmem>>, vector<16x2xf32>,
    } else {
    }
    return
  }
  func.func @transform_0(%arg0: i32) -> (i32, i32) {
    %c0_i32 = arith.constant 0 : i32
    %c0_i32_0 = arith.constant 0 : i32
    return %arg0, %c0_i32 : i32, i32
  }
  func.func @transform_1(%arg0: i32) -> (i32, i32) {
    %c0_i32 = arith.constant 0 : i32
    %c0_i32_0 = arith.constant 0 : i32
    return %arg0, %c0_i32 : i32, i32
  }
  func.func @transform_2(%arg0: i32) -> (i32, i32) {
    %c0_i32 = arith.constant 0 : i32
    %c0_i32_0 = arith.constant 0 : i32
    %c0_i32_1 = arith.constant 0 : i32
    return %c0_i32, %c0_i32_0 : i32, i32
  }
}

</mosaic_0001>

<llo_original>
// kernel: tpu_custom_call.1
$region0: #{tpu_custom_call.1}
  #allocation0 [shape = 'u32[]', space=smem, size = 0x4, offset = 0x4, fixed_abs, tag = 'smem constant byte address 0x4 - core index']
  #allocation1 [shape = 'u32[72,128]{1,0:T(1,128)}', space=vmem, size = 0x9000, scoped, tag = 'internal scratch']
  #allocation2 [shape = 'f32[16,6]{1,0:T(8,128)}', space=vmem, size = 0x2000, scoped, tag = 'scratch operand']
  %s0 = inlined_call_operand.vmem [shape: bf16[64,16], index: 0, kind: input, shape index: {}]
  %s1 = inlined_call_operand.vmem [shape: f32[64,32], index: 1, kind: input, shape index: {}]
  %s2 = inlined_call_operand.vmem [shape: f32[16,2], index: 2, kind: output, shape index: {}]
  %s3 = sld [smem:[#allocation0]]
  $region49: #{tpu_custom_call.1} parent=0
    _
  %s5 = ssub.s32 1, %s3
  %s6 = scalar_select 0, %s5, %s3
  loop: start=0, step=1, limit=4
  $region2: #{tpu_custom_call.1} parent=0 // loop_pre_header
    _
  $region3: #{tpu_custom_call.1} parent=0 // loop_header
    %s8 = sphi 0, %s12
    %p9 = scmp.ge.s32.totalorder %s8, 4
    %s18 = sphi 0, %s20
    %s21 = sphi 0, %s18
    %s22 = sphi 0, %s21
    %s38 = sphi 0, %s22
    %s44 = sphi 0, %s46
    %s47 = sphi 0, %s44
    %s48 = sphi 0, %s47
    %s64 = sphi 0, %s48
    %s68 = sphi 0, %s68
    %s70 = sphi 0, %s68
    %s71 = sphi 0, %s70
    %s85 = sphi 0, %s71
  $region4: #{tpu_custom_call.1} parent=0 // loop_header_branch
    %11 = sbr.rel (%p9) target = $region8
  $region5: #{tpu_custom_call.1} parent=0 // loop_body
    %s13 = ssub.s32 %s8, 1
    %s14 = ssub.s32 %s8, 2
    %s15 = sadd.s32 %s8, 1
    %s16 = ssub.s32 %s8, %s15
    %p17 = scmp.eq.s32.totalorder %s16, 0
    %s19 = sadd.s32 %s18, 1
    %s20 = scalar_select %p17, %s18, %s19
    %p23 = pneg %p17
    %p24 = scmp.eq.s32.totalorder %s8, 1
    %p25 = por %p23, %p24
    %p26 = scmp.ne.s32.totalorder %s18, %s21
    %p27 = scmp.eq.s32.totalorder %s8, 0
    %p28 = por %p26, %p27
    %p29 = scmp.ne.s32.totalorder %s18, %s21
    %p30 = scmp.eq.s32.totalorder %s13, 1
    %p31 = por %p29, %p30
    %p32 = scmp.ne.s32.totalorder %s21, %s22
    %p33 = scmp.eq.s32.totalorder %s13, 0
    %p34 = por %p32, %p33
    %p35 = scmp.ne.s32.totalorder %s21, %s22
    %p36 = scmp.eq.s32.totalorder %s14, 1
    %p37 = por %p35, %p36
    %p39 = scmp.ne.s32.totalorder %s22, %s38
    %p40 = scmp.eq.s32.totalorder %s14, 0
    %p41 = por %p39, %p40
    %s42 = ssub.s32 %s8, %s15
    %p43 = scmp.eq.s32.totalorder %s42, 0
    %s45 = sadd.s32 %s44, 1
    %s46 = scalar_select %p43, %s44, %s45
    %p49 = pneg %p43
    %p50 = scmp.eq.s32.totalorder %s8, 1
    %p51 = por %p49, %p50
    %p52 = scmp.ne.s32.totalorder %s44, %s47
    %p53 = scmp.eq.s32.totalorder %s8, 0
    %p54 = por %p52, %p53
    %p55 = scmp.ne.s32.totalorder %s44, %s47
    %p56 = scmp.eq.s32.totalorder %s13, 1
    %p57 = por %p55, %p56
    %p58 = scmp.ne.s32.totalorder %s47, %s48
    %p59 = scmp.eq.s32.totalorder %s13, 0
    %p60 = por %p58, %p59
    %p61 = scmp.ne.s32.totalorder %s47, %s48
    %p62 = scmp.eq.s32.totalorder %s14, 1
    %p63 = por %p61, %p62
    %p65 = scmp.ne.s32.totalorder %s48, %s64
    %p66 = scmp.eq.s32.totalorder %s14, 0
    %p67 = por %p65, %p66
    %s69 = sadd.s32 %s68, 1
    %p72 = scmp.eq.s32.totalorder %s8, 1
    %p73 = scmp.ne.s32.totalorder %s68, %s70
    %p74 = scmp.eq.s32.totalorder %s8, 0
    %p75 = por %p73, %p74
    %p76 = scmp.ne.s32.totalorder %s68, %s70
    %p77 = scmp.eq.s32.totalorder %s13, 1
    %p78 = por %p76, %p77
    %p79 = scmp.ne.s32.totalorder %s70, %s71
    %p80 = scmp.eq.s32.totalorder %s13, 0
    %p81 = por %p79, %p80
    %p82 = scmp.ne.s32.totalorder %s70, %s71
    %p83 = scmp.eq.s32.totalorder %s14, 1
    %p84 = por %p82, %p83
    %p86 = scmp.ne.s32.totalorder %s71, %s85
    %p87 = scmp.eq.s32.totalorder %s14, 0
    %p88 = por %p86, %p87
    %p89 = scmp.le.s32.totalorder 1, %s8
    %p90 = scmp.lt.s32.totalorder %s8, 3
    %p91 = pnand %p89, %p90
    %p92 = pneg %p91
    // Predicated region
    $region9: #{tpu_custom_call.1} parent=5 // pred_check
      _
    $region10: #{tpu_custom_call.1} parent=5 // pred_check_branch
      %94 = sbr.rel (%p91) target = $region12
    $region11: #{tpu_custom_call.1} parent=5 // pred_region
      %s95 = ssub.s32 %s8, 1
    $region12: #{tpu_custom_call.1} parent=5 // pred_fallthru
      _
    %p96 = scmp.lt.s32.totalorder %s8, 2
    // Predicated region
    $region13: #{tpu_custom_call.1} parent=5 // pred_check
      %p97 = pneg %p96
    $region14: #{tpu_custom_call.1} parent=5 // pred_check_branch
      %99 = sbr.rel (%p97) target = $region16
    $region15: #{tpu_custom_call.1} parent=5 // pred_region
      // Predicated region
      $region17: #{tpu_custom_call.1} parent=15 // pred_check
        %p100 = pneg %p28
      $region18: #{tpu_custom_call.1} parent=15 // pred_check_branch
        %102 = sbr.rel (%p100) target = $region20
      $region19: #{tpu_custom_call.1} parent=15 // pred_region
        %s103 = smul.u32 4, %s8
        %p104 = scmp.lt.s32.totalorder %s103, 7
        %s105 = scalar_select %p104, %s103, 7
        %s106 = smul.addr %s105, 4
        %s107 = scalar_lea.vmem %s0, %s106
        %s108 = smul.u32 4, %s8
      $region20: #{tpu_custom_call.1} parent=15 // pred_fallthru
        _
      // Predicated region
      $region21: #{tpu_custom_call.1} parent=15 // pred_check
        %p109 = pneg %p54
      $region22: #{tpu_custom_call.1} parent=15 // pred_check_branch
        %111 = sbr.rel (%p109) target = $region24
      $region23: #{tpu_custom_call.1} parent=15 // pred_region
        %s112 = smul.u32 4, %s8
        %p113 = scmp.lt.s32.totalorder %s112, 7
        %s114 = scalar_select %p113, %s112, 7
        %s115 = smul.addr %s114, 8
        %s116 = scalar_lea.vmem %s1, %s115
        %s117 = smul.u32 4, %s8
      $region24: #{tpu_custom_call.1} parent=15 // pred_fallthru
        _
    $region16: #{tpu_custom_call.1} parent=5 // pred_fallthru
      _
    %p118 = scmp.le.s32.totalorder 1, %s8
    %p119 = scmp.lt.s32.totalorder %s8, 3
    %p120 = pnand %p118, %p119
    %p121 = pneg %p120
    // Predicated region
    $region25: #{tpu_custom_call.1} parent=5 // pred_check
      _
    $region26: #{tpu_custom_call.1} parent=5 // pred_check_branch
      %123 = sbr.rel (%p120) target = $region28
    $region27: #{tpu_custom_call.1} parent=5 // pred_region
      %s124 = ssub.s32 %s8, 1
      %s125 = smul.u32 4, %s13
      %p126 = scmp.lt.s32.totalorder %s125, 7
      %s127 = scalar_select %p126, %s125, 7
      %s128 = smul.addr %s127, 4
      %s129 = scalar_lea.vmem %s0, %s128
      %p130 = pneg %p34
      %p131 = pneg %p31
      %s132 = smul.u32 4, %s13
      %p133 = scmp.lt.s32.totalorder %s132, 7
      %s134 = scalar_select %p133, %s132, 7
      %s135 = smul.addr %s134, 8
      %s136 = scalar_lea.vmem %s1, %s135
      %p137 = pneg %p60
      %p138 = pneg %p57
      %p139 = pneg %p81
      %p140 = pneg %p78
      %s141 = smul.u32 4, %s13
      %p142 = scmp.lt.s32.totalorder %s141, 7
      %s143 = scalar_select %p142, %s141, 7
      %s144 = smul.addr %s143, 4
      %s145 = scalar_lea.vmem %s0, %s144
      %s146 = smul.u32 4, %s13
      %s147 = smul.u32 4, %s13
      %p148 = scmp.lt.s32.totalorder %s147, 7
      %s149 = scalar_select %p148, %s147, 7
      %s150 = smul.addr %s149, 8
      %s151 = scalar_lea.vmem %s1, %s150
      %s152 = smul.u32 4, %s13
      %p154 = scmp.eq.s32.totalorder %s13, 0
      // Predicated region
      $region29: #{tpu_custom_call.1} parent=27 // pred_check
        %p155 = pneg %p154
      $region30: #{tpu_custom_call.1} parent=27 // pred_check_branch
        %157 = sbr.rel (%p155) target = $region32
      $region31: #{tpu_custom_call.1} parent=27 // pred_region
        %vm158 = vcmask 48128
        %159 = vst.msk [vmem:[#allocation2] sm:$0xff] %vm158, 0.0
        %160 = vst.msk [vmem:[#allocation2 + $0x8] sm:$0xff] %vm158, 0.0
      $region32: #{tpu_custom_call.1} parent=27 // pred_fallthru
        _
      %v161 = vld [vmem:[%s151] sm:$0xff]
      %v162 = vld [vmem:[%s151 + $0x8] sm:$0xff]
      %v163 = vld [vmem:[%s151 + $0x10] sm:$0xff]
      %v164 = vld [vmem:[%s151 + $0x18] sm:$0xff]
      %vm165 = vcmask 261120
      %v166 = vsel %vm165, %v161, 0.0
      %167 = vadd.xlane.f32.xlu0 %v166
      %v168 = vpop.xlane.xlu0 %167
      %v169 = vsel %vm165, %v162, 0.0
      %170 = vadd.xlane.f32.xlu0 %v169
      %v171 = vpop.xlane.xlu0 %170
      %v172 = vsel %vm165, %v163, 0.0
      %173 = vadd.xlane.f32.xlu0 %v172
      %v174 = vpop.xlane.xlu0 %173
      %v175 = vsel %vm165, %v164, 0.0
      %176 = vadd.xlane.f32.xlu0 %v175
      %v177 = vpop.xlane.xlu0 %176
      %v178 = vmul.f32 %v161, %v161
      %v179 = vmul.f32 %v162, %v162
      %v180 = vmul.f32 %v163, %v163
      %v181 = vmul.f32 %v164, %v164
      %v182 = vsel %vm165, %v178, 0.0
      %183 = vadd.xlane.f32.xlu0 %v182
      %v184 = vpop.xlane.xlu0 %183
      %v185 = vsel %vm165, %v179, 0.0
      %186 = vadd.xlane.f32.xlu0 %v185
      %v187 = vpop.xlane.xlu0 %186
      %v188 = vsel %vm165, %v180, 0.0
      %189 = vadd.xlane.f32.xlu0 %v188
      %v190 = vpop.xlane.xlu0 %189
      %v191 = vsel %vm165, %v181, 0.0
      %192 = vadd.xlane.f32.xlu0 %v191
      %v193 = vpop.xlane.xlu0 %192
      %vm194 = vcmask 7168
      %v195 = vsel %vm194, %v168, %v184
      %v196 = vsel %vm194, %v171, %v187
      %v197 = vsel %vm194, %v174, %v190
      %v198 = vsel %vm194, %v177, %v193
      %vm199 = vcmask 15360
      %v200 = vsel %vm199, %v195, 1.0
      %v201 = vsel %vm199, %v196, 1.0
      %v202 = vsel %vm199, %v197, 1.0
      %v203 = vsel %vm199, %v198, 1.0
      %v204 = vpack.c.bf16 %v200, %v200
      %v205 = vpack.c.bf16 %v201, %v201
      %v206 = vpack.c.bf16 %v202, %v202
      %v207 = vpack.c.bf16 %v203, %v203
      %v208 = vunpack.c.l.bf16 %v204
      %v209 = vunpack.c.l.bf16 %v205
      %v210 = vunpack.c.l.bf16 %v206
      %v211 = vunpack.c.l.bf16 %v207
      %v212 = vsub.f32 %v200, %v208
      %v213 = vsub.f32 %v201, %v209
      %v214 = vsub.f32 %v202, %v210
      %v215 = vsub.f32 %v203, %v211
      %v216 = vpack.c.bf16 %v212, %v212
      %v217 = vpack.c.bf16 %v213, %v213
      %v218 = vpack.c.bf16 %v214, %v214
      %v219 = vpack.c.bf16 %v215, %v215
      %v224 = vunpack.c.l.b16 %v204
      %v225 = vunpack.c.l.b16 %v205
      %v226 = vunpack.c.l.b16 %v206
      %v227 = vunpack.c.l.b16 %v207
      %v228 = vpack.c.b16 %v225, %v224
      %v229 = vpack.c.b16 %v227, %v226
      %v234 = vunpack.c.l.b16 %v216
      %v235 = vunpack.c.l.b16 %v217
      %v236 = vunpack.c.l.b16 %v218
      %v237 = vunpack.c.l.b16 %v219
      %v238 = vpack.c.b16 %v235, %v234
      %v239 = vpack.c.b16 %v237, %v236
      %240 = vrot.lane.b32.xlu0 %v238, 3
      %v241 = vpop.permute.xlu0 %240
      %242 = vrot.lane.b32.xlu0 %v239, 3
      %v243 = vpop.permute.xlu0 %242
      %vm244 = vcmask 23552
      %v247 = vsel %vm244, %v228, %v241
      %v251 = vsel %vm244, %v229, %v243
      %v253 = vld [vmem:[#allocation2] sm:$0xff]
      %v254 = vld [vmem:[#allocation2 + $0x8] sm:$0xff]
      %v255 = vld [vmem:[%s145] sm:$0xf]
      %v256 = vld [vmem:[%s145 + $0x4] sm:$0xf]
      %v257 = vld [vmem:[%s145 + $0x8] sm:$0xf]
      %v258 = vld [vmem:[%s145 + $0xc] sm:$0xf]
      %v263 = vunpack.c.l.b16 %v255
      %v264 = vunpack.c.l.b16 %v256
      %v265 = vunpack.c.l.b16 %v257
      %v266 = vunpack.c.l.b16 %v258
      %v267 = vpack.c.b16 %v264, %v263
      %v268 = vpack.c.b16 %v266, %v265
      %271 = vxpose.xlu0.c.b16.start [1/8] %v267, 128
      %272 = vxpose.xlu0.c.b16.cont [2/8] %v268, 128
      %273 = vxpose.xlu0.c.b16.cont [3/8] 0, 128
      %274 = vxpose.xlu0.c.b16.cont [4/8] 0, 128
      %275 = vxpose.xlu0.c.b16.cont [5/8] 0, 128
      %276 = vxpose.xlu0.c.b16.cont [6/8] 0, 128
      %277 = vxpose.xlu0.c.b16.cont [7/8] 0, 128
      %278 = vxpose.xlu0.c.b16.end [8/8] 0, 128
      %v279 = vpop.trf.xlu0
      %v280 = vpop.trf.xlu0
      %v281 = vpop.trf.xlu0
      %v282 = vpop.trf.xlu0
      %v283 = vpop.trf.xlu0
      %v284 = vpop.trf.xlu0
      %v285 = vpop.trf.xlu0
      %v286 = vpop.trf.xlu0
      %v288 = vsel %vm165, %v279, 0
      %290 = vmatpush.bf16.msra.mxu0 0
      %291 = vmatpush.bf16.msra.mxu0 0
      %292 = vmatpush.bf16.msra.mxu0 0
      %293 = vmatpush.bf16.msra.mxu0 0
      %294 = vmatpush.bf16.msra.mxu0 0
      %295 = vmatpush.bf16.msra.mxu0 0
      %296 = vmatpush.bf16.msra.mxu0 %v251
      %297 = vmatpush.bf16.msra.mxu0 %v247
      %298 = vmatmul.bf16.gmra.mxu0 %v288
      %v299 = vpop.f32.mrf.mxu0
      %v300 = vadd.f32 0.0, %v299
      %v301 = vpop.f32.mrf.mxu0
      %v302 = vadd.f32 0.0, %v301
      %303 = vdwg.mxu0
      %v304 = vadd.f32 %v253, %v300
      %v305 = vadd.f32 %v254, %v302
      %vm306 = vcmask 48128
      %307 = vst.msk [vmem:[#allocation2] sm:$0xff] %vm306, %v304
      %308 = vst.msk [vmem:[#allocation2 + $0x8] sm:$0xff] %vm306, %v305
      %p309 = scmp.eq.s32.totalorder %s13, 1
      // Predicated region
      $region33: #{tpu_custom_call.1} parent=27 // pred_check
        %p310 = pneg %p309
      $region34: #{tpu_custom_call.1} parent=27 // pred_check_branch
        %312 = sbr.rel (%p310) target = $region36
      $region35: #{tpu_custom_call.1} parent=27 // pred_region
        %v313 = vld [vmem:[#allocation2] sm:$0xff]
        %v314 = vld [vmem:[#allocation2 + $0x8] sm:$0xff]
        %317 = vrot.lane.b32.xlu0 %v313, 125
        %v318 = vpop.permute.xlu0 %317
        %319 = vrot.lane.b32.xlu0 %v314, 125
        %v320 = vpop.permute.xlu0 %319
        %v323 = vadd.f32 %v313, %v318
        %v324 = vadd.f32 %v314, %v320
        %v325 = vmul.f32 %v313, 32.0
        %v326 = vmul.f32 %v314, 32.0
        %v327 = vmax.f32 %v325, 1.0
        %v328 = vmax.f32 %v326, 1.0
        %331 = vrot.lane.b32.xlu0 %v327, 126
        %v332 = vpop.permute.xlu0 %331
        %333 = vrot.lane.b32.xlu0 %v328, 126
        %v334 = vpop.permute.xlu0 %333
        %v337 = vrcp.pop %v332
        %v338 = vmul.f32 %v332, %v337
        %v339 = vsub.f32 1.0, %v338
        %v340 = vmul.f32 %v337, %v339
        %v341 = vadd.f32 %v337, %v340
        %vm342 = vweird.f32 %v332
        %vm343 = vweird.f32 %v337
        %vm344 = vmor %vm342, %vm343
        %v345 = vsel %vm344, %v337, %v341
        %v346 = vand.u32 2147483647, %v332
        %vm347 = vcmp.eq.f32.partialorder %v346, 8.507059e+37
        %v348 = vand.u32 %v332, 2147483648
        %v349 = vor.u32 1.1754944e-38, %v348
        %v350 = vsel %vm347, %v349, %v345
        %v351 = vmul.f32 %v323, %v350
        %v352 = vrcp.pop %v334
        %v353 = vmul.f32 %v334, %v352
        %v354 = vsub.f32 1.0, %v353
        %v355 = vmul.f32 %v352, %v354
        %v356 = vadd.f32 %v352, %v355
        %vm357 = vweird.f32 %v334
        %vm358 = vweird.f32 %v352
        %vm359 = vmor %vm357, %vm358
        %v360 = vsel %vm359, %v352, %v356
        %v361 = vand.u32 2147483647, %v334
        %vm362 = vcmp.eq.f32.partialorder %v361, 8.507059e+37
        %v363 = vand.u32 %v334, 2147483648
        %v364 = vor.u32 1.1754944e-38, %v363
        %v365 = vsel %vm362, %v364, %v360
        %v366 = vmul.f32 %v324, %v365
        %369 = vrot.lane.b32.xlu0 %v351, 2
        %v370 = vpop.permute.xlu0 %369
        %371 = vrot.lane.b32.xlu0 %v366, 2
        %v372 = vpop.permute.xlu0 %371
        %v375 = vmul.f32 %v325, %v370
        %v376 = vmul.f32 %v326, %v372
        %v377 = vmul.f32 %v375, %v370
        %v378 = vmul.f32 %v376, %v372
        %381 = vrot.lane.b32.xlu0 %v377, 127
        %v382 = vpop.permute.xlu0 %381
        %383 = vrot.lane.b32.xlu0 %v378, 127
        %v384 = vpop.permute.xlu0 %383
        %v387 = vsub.f32 %v323, %v382
        %v388 = vsub.f32 %v324, %v384
        %v389 = vsub.f32 %v325, 1.0
        %v390 = vsub.f32 %v326, 1.0
        %v391 = vmax.f32 %v389, 1.0
        %v392 = vmax.f32 %v390, 1.0
        %395 = vrot.lane.b32.xlu0 %v391, 127
        %v396 = vpop.permute.xlu0 %395
        %397 = vrot.lane.b32.xlu0 %v392, 127
        %v398 = vpop.permute.xlu0 %397
        %v401 = vrcp.pop %v396
        %v402 = vmul.f32 %v396, %v401
        %v403 = vsub.f32 1.0, %v402
        %v404 = vmul.f32 %v401, %v403
        %v405 = vadd.f32 %v401, %v404
        %vm406 = vweird.f32 %v396
        %vm407 = vweird.f32 %v401
        %vm408 = vmor %vm406, %vm407
        %v409 = vsel %vm408, %v401, %v405
        %v410 = vand.u32 2147483647, %v396
        %vm411 = vcmp.eq.f32.partialorder %v410, 8.507059e+37
        %v412 = vand.u32 %v396, 2147483648
        %v413 = vor.u32 1.1754944e-38, %v412
        %v414 = vsel %vm411, %v413, %v409
        %v415 = vmul.f32 %v387, %v414
        %v416 = vrcp.pop %v398
        %v417 = vmul.f32 %v398, %v416
        %v418 = vsub.f32 1.0, %v417
        %v419 = vmul.f32 %v416, %v418
        %v420 = vadd.f32 %v416, %v419
        %vm421 = vweird.f32 %v398
        %vm422 = vweird.f32 %v416
        %vm423 = vmor %vm421, %vm422
        %v424 = vsel %vm423, %v416, %v420
        %v425 = vand.u32 2147483647, %v398
        %vm426 = vcmp.eq.f32.partialorder %v425, 8.507059e+37
        %v427 = vand.u32 %v398, 2147483648
        %v428 = vor.u32 1.1754944e-38, %v427
        %v429 = vsel %vm426, %v428, %v424
        %v430 = vmul.f32 %v388, %v429
        %v431 = vmax.f32 %v415, 0.0
        %v432 = vmax.f32 %v430, 0.0
        %v433 = vrsqrt.pop %v431
        %v434 = vmul.f32 %v433, %v431
        %v435 = vmul.f32 %v434, %v433
        %v436 = vmul.f32 0.5, %v435
        %v437 = vsub.f32 1.5, %v436
        %v438 = vmul.f32 %v433, %v437
        %v439 = vmul.f32 %v431, %v438
        %vm440 = vcmp.eq.f32.partialorder %v431, inf
        %v441 = vsel %vm440, %v431, %v439
        %vm442 = vcmp.eq.f32.partialorder %v431, 0.0
        %v443 = vand.u32 %v431, 2147483648
        %v444 = vsel %vm442, %v443, %v441
        %v445 = vrsqrt.pop %v432
        %v446 = vmul.f32 %v445, %v432
        %v447 = vmul.f32 %v446, %v445
        %v448 = vmul.f32 0.5, %v447
        %v449 = vsub.f32 1.5, %v448
        %v450 = vmul.f32 %v445, %v449
        %v451 = vmul.f32 %v432, %v450
        %vm452 = vcmp.eq.f32.partialorder %v432, inf
        %v453 = vsel %vm452, %v432, %v451
        %vm454 = vcmp.eq.f32.partialorder %v432, 0.0
        %v455 = vand.u32 %v432, 2147483648
        %v456 = vsel %vm454, %v455, %v453
        %v457 = vadd.f32 %v444, 1e-05
        %v458 = vadd.f32 %v456, 1e-05
        %v459 = vrcp.pop %v457
        %v460 = vrcp.pop %v458
        %v461 = vmul.f32 %v457, %v459
        %v462 = vmul.f32 %v458, %v460
        %v463 = vsub.f32 2.0, %v461
        %v464 = vsub.f32 2.0, %v462
        %v465 = vmul.f32 %v459, %v463
        %v466 = vmul.f32 %v460, %v464
        %vm467 = vcmp.gt.f32.partialorder %v313, 0.0
        %vm468 = vcmp.gt.f32.partialorder %v314, 0.0
        %v469 = vsel %vm467, %v370, 0.0
        %v470 = vsel %vm468, %v372, 0.0
        %473 = vrot.lane.b32.xlu0 %v465, 1
        %v474 = vpop.permute.xlu0 %473
        %475 = vrot.lane.b32.xlu0 %v466, 1
        %v476 = vpop.permute.xlu0 %475
        %v479 = vsel %vm467, %v474, 0.0
        %v480 = vsel %vm468, %v476, 0.0
        %483 = vrot.lane.b32.xlu0 %v469, 126
        %v484 = vpop.permute.xlu0 %483
        %485 = vrot.lane.b32.xlu0 %v470, 126
        %v486 = vpop.permute.xlu0 %485
        %491 = vrot.lane.b32.xlu0 %v479, 127
        %v492 = vpop.permute.xlu0 %491
        %493 = vrot.lane.b32.xlu0 %v480, 127
        %v494 = vpop.permute.xlu0 %493
        %v497 = vsel %vm194, %v484, %v492
        %v498 = vsel %vm194, %v486, %v494
        %499 = vst.msk [vmem:[%s2] sm:$0xff] %vm199, %v497
        %500 = vst.msk [vmem:[%s2 + $0x8] sm:$0xff] %vm199, %v498
      $region36: #{tpu_custom_call.1} parent=27 // pred_fallthru
        _
      // Predicated region
      $region37: #{tpu_custom_call.1} parent=27 // pred_check
        %p501 = pneg %p78
      $region38: #{tpu_custom_call.1} parent=27 // pred_check_branch
        %503 = sbr.rel (%p501) target = $region40
      $region39: #{tpu_custom_call.1} parent=27 // pred_region
        _
      $region40: #{tpu_custom_call.1} parent=27 // pred_fallthru
        _
      // Predicated region
      $region41: #{tpu_custom_call.1} parent=27 // pred_check
        %p504 = pneg %p78
      $region42: #{tpu_custom_call.1} parent=27 // pred_check_branch
        %506 = sbr.rel (%p504) target = $region44
      $region43: #{tpu_custom_call.1} parent=27 // pred_region
        _
      $region44: #{tpu_custom_call.1} parent=27 // pred_fallthru
        _
    $region28: #{tpu_custom_call.1} parent=5 // pred_fallthru
      _
    %p507 = scmp.le.s32.totalorder 2, %s8
    // Predicated region
    $region45: #{tpu_custom_call.1} parent=5 // pred_check
      %p508 = pneg %p507
    $region46: #{tpu_custom_call.1} parent=5 // pred_check_branch
      %510 = sbr.rel (%p508) target = $region48
    $region47: #{tpu_custom_call.1} parent=5 // pred_region
      %s511 = ssub.s32 %s8, 2
    $region48: #{tpu_custom_call.1} parent=5 // pred_fallthru
      _
  $region6: #{tpu_custom_call.1} parent=0 // loop_footer
    %s12 = sadd.s32 1, %s8
  $region7: #{tpu_custom_call.1} parent=0 // loop_footer_branch
    %7 = sbr.rel target = $region3
  $region8: #{tpu_custom_call.1} parent=0 // loop_exit
    _

</llo_original>
